<compile_context>
chip_gen: v7x
topology: tpu7x:2x2x1
jax: 0.10.0
libtpu: 0.0.40
codegen_flags: <defaults>
</compile_context>

<pallas_src>
import functools
import math

import jax
import jax.numpy as jnp
from jax import lax
from jax.experimental import pallas as pl
from jax.experimental.pallas import tpu as pltpu


# ---------------------------------------------------------------------------
# Fully fused MHA kernel (single invocation, everything in VMEM)
# ---------------------------------------------------------------------------
def _mha_fused_kernel(q_ref, k_ref, v_ref,
                      wqT_ref, bq_ref, wk_ref, bkc_ref, wvT_ref, bv_ref,
                      woT_ref, bo_ref,
                      hmk_ref, hmv_ref, vmask_ref,
                      o_ref, *, num_heads):
    """Shapes (LN = L*N rows ordered row-major over (l, n); SN = S*N):
       q_ref      (LN, E)
       k_ref/v_ref (SN, E)
       wqT_ref    (E, E)   (Wq * 1/sqrt(Dh))^T        bq_ref  (1, E)  scaled
       wk_ref     (E, E)   Wk (untransposed)          bkc_ref (E, 1)
       wvT_ref    (E, E)   Wv^T                       bv_ref  (1, E)
       woT_ref    (E, E)   Wout^T                     bo_ref  (1, E)
       hmk_ref    (E, H*SN)   head block mask for block-diag K^T
       hmv_ref    (H*SN, E)   head block mask for block-diag V (also used to
                              broadcast per-head softmax denominators)
       vmask_ref  (LN, H*SN)  same-batch validity mask (0/1)
       o_ref      (LN, E)
    """
    f32 = jnp.float32
    H = num_heads

    # --- input projections (all plain NN matmuls on the MXU) ----------------
    qp = jnp.dot(q_ref[...], wqT_ref[...], preferred_element_type=f32) + bq_ref[...]
    vp = jnp.dot(v_ref[...], wvT_ref[...], preferred_element_type=f32) + bv_ref[...]
    # K projection computed already transposed: (E, SN) = Wk @ k^T + bk
    kpT = lax.dot_general(wk_ref[...], k_ref[...], (((1,), (1,)), ((), ())),
                          preferred_element_type=f32) + bkc_ref[...]

    # --- block-diagonal head layout along lanes ------------------------------
    # Kbd (E, H*SN): block h = kh^T at rows [h*Dh,(h+1)*Dh), cols [h*SN,(h+1)*SN)
    kbd = jnp.concatenate([kpT] * H, axis=1) * hmk_ref[...]
    # Vbd (H*SN, E): block h = vh at rows [h*SN,(h+1)*SN), cols [h*Dh,(h+1)*Dh)
    vbd = jnp.concatenate([vp] * H, axis=0) * hmv_ref[...]

    # --- all heads' scores in one lane-dense (LN, H*SN) slab ----------------
    s = jnp.dot(qp, kbd, preferred_element_type=f32)                # (LN, H*SN)
    # Global per-row max is a valid stability shift for every head block
    # (all entries are genuine same-magnitude scores); cross-batch entries are
    # zeroed AFTER exp (NaN-safe where-after-exp formulation).
    m = jnp.max(s, axis=-1, keepdims=True)
    p = jnp.exp(s - m) * vmask_ref[...]                             # (LN, H*SN)

    # Per-(row, head) denominators, broadcast to the head's Dh output columns
    # with a single tiny MXU op (hmv doubles as the broadcast matrix).
    l_b = jnp.dot(p, hmv_ref[...], preferred_element_type=f32)      # (LN, E)
    inv_l = pl.reciprocal(l_b, approx=True)                         # EUP slot

    ctx = jnp.dot(p, vbd, preferred_element_type=f32) * inv_l       # (LN, E)

    # --- output projection (head merge already done by the block layout) ----
    out = jnp.dot(ctx, woT_ref[...], preferred_element_type=f32) + bo_ref[...]
    o_ref[...] = out.astype(o_ref.dtype)


# ---------------------------------------------------------------------------
# Wrapper: only free (contiguous) reshapes outside the kernel
# ---------------------------------------------------------------------------
def multihead_attention(query, key, value, kparams, num_heads):
    """query: (L, N, E), key/value: (S, N, E). Returns (L, N, E)."""
    L, N, E = query.shape
    S = key.shape[0]

    q2 = query.reshape(L * N, E)            # contiguous reshape (no transpose)
    k2 = key.reshape(S * N, E)
    v2 = value.reshape(S * N, E)

    kernel = functools.partial(_mha_fused_kernel, num_heads=num_heads)
    vmem = lambda: pl.BlockSpec(memory_space=pltpu.MemorySpace.VMEM)

    out2 = pl.pallas_call(
        kernel,
        out_shape=jax.ShapeDtypeStruct((L * N, E), query.dtype),
        in_specs=[vmem() for _ in range(14)],
        out_specs=vmem(),
    )(q2, k2, v2,
      kparams["wqT"], kparams["bq"], kparams["wk"], kparams["bk_col"],
      kparams["wvT"], kparams["bv"], kparams["woT"], kparams["bo"],
      kparams["head_mask_k"], kparams["head_mask_v"], kparams["valid_mask"])

    return out2.reshape(L, N, E)            # free reshape back to (L, N, E)


# ---------------------------------------------------------------------------
# One-time parameter / constant-mask preparation (outside the hot path)
# ---------------------------------------------------------------------------
def prepare_kernel_params(params, num_heads, L, S, N):
    E = params["out_proj_weight"].shape[0]
    H = num_heads
    Dh = E // H
    LN, SN = L * N, S * N
    f32 = jnp.float32

    w_in = params["in_proj_weight"]
    b_in = params["in_proj_bias"]
    wq, wk, wv = w_in[:E], w_in[E:2 * E], w_in[2 * E:]
    bq, bk, bv = b_in[:E], b_in[E:2 * E], b_in[2 * E:]
    scale = 1.0 / math.sqrt(Dh)             # folded into Wq / bq here, once

    col = jnp.arange(H * SN)
    row = jnp.arange(LN)
    valid_mask = ((row[:, None] % N) == (col[None, :] % N)).astype(f32)
    head_mask_k = ((jnp.arange(E)[:, None] // Dh) == (col[None, :] // SN)).astype(f32)
    head_mask_v = ((col[:, None] // SN) == (jnp.arange(E)[None, :] // Dh)).astype(f32)

    return {
        "wqT": (wq * scale).T,              # (E, E)
        "bq": (bq * scale).reshape(1, E),
        "wk": wk,                           # (E, E) untransposed (kpT = Wk @ k^T)
        "bk_col": bk.reshape(E, 1),
        "wvT": wv.T,                        # (E, E)
        "bv": bv.reshape(1, E),
        "woT": params["out_proj_weight"].T, # (E, E)
        "bo": params["out_proj_bias"].reshape(1, E),
        "head_mask_k": head_mask_k,         # (E, H*SN)
        "head_mask_v": head_mask_v,         # (H*SN, E)
        "valid_mask": valid_mask,           # (LN, H*SN)
    }


# ---------------------------------------------------------------------------
# Deterministic parameter init (xavier-uniform weights, small random biases)
# ---------------------------------------------------------------------------
def init_params(key, embed_dim):
    k1, k2, k3, k4 = jax.random.split(key, 4)
    bound = math.sqrt(6.0 / (embed_dim + embed_dim))
    in_proj_weight = jax.random.uniform(
        k1, (3 * embed_dim, embed_dim), jnp.float32, -bound, bound)
    out_proj_weight = jax.random.uniform(
        k2, (embed_dim, embed_dim), jnp.float32, -bound, bound)
    # PyTorch zero-inits these; use small random values so the bias paths are
    # actually exercised by the correctness check.
    in_proj_bias = jax.random.uniform(
        k3, (3 * embed_dim,), jnp.float32, -0.1, 0.1)
    out_proj_bias = jax.random.uniform(
        k4, (embed_dim,), jnp.float32, -0.1, 0.1)
    return {
        "in_proj_weight": in_proj_weight,
        "in_proj_bias": in_proj_bias,
        "out_proj_weight": out_proj_weight,
        "out_proj_bias": out_proj_bias,
    }


if __name__ == "__main__":
    E = 32        # d_model
    H = 4         # n_head
    L = 8         # query sequence length
    S = 16        # key / value sequence length
    N = 2         # batch size
    # dropout_p = 0.0 (eval semantics; dropout is a no-op)

    root = jax.random.PRNGKey(0)
    kq, kk, kv, kprm = jax.random.split(root, 4)

    query = jax.random.normal(kq, (L, N, E), jnp.float32)
    key_t = jax.random.normal(kk, (S, N, E), jnp.float32)
    value = jax.random.normal(kv, (S, N, E), jnp.float32)
    params = init_params(kprm, E)
    kparams = prepare_kernel_params(params, H, L, S, N)   # one-time prep

    fwd = jax.jit(lambda q, k, v: multihead_attention(q, k, v, kparams, H))
    out = fwd(query, key_t, value)
    jax.block_until_ready(out)

    assert out.shape == (L, N, E)

    # pure-JAX reference (PyTorch MultiheadAttention forward, dropout off)
    def ref(q, k, v):
        wq = params["in_proj_weight"][:E]
        wk_ = params["in_proj_weight"][E:2 * E]
        wv = params["in_proj_weight"][2 * E:]
        bq = params["in_proj_bias"][:E]
        bk_ = params["in_proj_bias"][E:2 * E]
        bv = params["in_proj_bias"][2 * E:]
        Dh = E // H
        qp = (q @ wq.T + bq).reshape(L, N * H, Dh).transpose(1, 0, 2) / math.sqrt(Dh)
        kp_ = (k @ wk_.T + bk_).reshape(S, N * H, Dh).transpose(1, 0, 2)
        vp = (v @ wv.T + bv).reshape(S, N * H, Dh).transpose(1, 0, 2)
        s = jnp.einsum("bld,bsd->bls", qp, kp_)
        p = jax.nn.softmax(s, axis=-1)
        o = jnp.einsum("bls,bsd->bld", p, vp).transpose(1, 0, 2).reshape(L, N, E)
        return o @ params["out_proj_weight"].T + params["out_proj_bias"]

    ref_out = ref(query, key_t, value)
    # 2e-3 tolerance accommodates the approximate (EUP) softmax reciprocal
    # (~2^-12 relative error); all matmuls / softmax math are f32.
    assert jnp.allclose(out, ref_out, atol=2e-3, rtol=2e-3), (
        float(jnp.max(jnp.abs(out - ref_out))))

    print("KERNEL_OK")
</pallas_src>

<mosaic_0001>
module attributes {stable_mosaic.version = 11 : i64} {
  func.func @_mha_fused_kernel(%arg0: memref<16x32xf32, #tpu.memory_space<vmem>>, %arg1: memref<32x32xf32, #tpu.memory_space<vmem>>, %arg2: memref<32x32xf32, #tpu.memory_space<vmem>>, %arg3: memref<32x32xf32, #tpu.memory_space<vmem>>, %arg4: memref<1x32xf32, #tpu.memory_space<vmem>>, %arg5: memref<32x32xf32, #tpu.memory_space<vmem>>, %arg6: memref<32x1xf32, #tpu.memory_space<vmem>>, %arg7: memref<32x32xf32, #tpu.memory_space<vmem>>, %arg8: memref<1x32xf32, #tpu.memory_space<vmem>>, %arg9: memref<32x32xf32, #tpu.memory_space<vmem>>, %arg10: memref<1x32xf32, #tpu.memory_space<vmem>>, %arg11: memref<32x128xf32, #tpu.memory_space<vmem>>, %arg12: memref<128x32xf32, #tpu.memory_space<vmem>>, %arg13: memref<16x128xf32, #tpu.memory_space<vmem>>, %arg14: memref<16x32xf32, #tpu.memory_space<vmem>>) attributes {dimension_semantics = [], scalar_prefetch = 0 : i64, scratch_operands = 0 : i64, tpu.core_type = #tpu.core_type<tc>} {
    %c0 = arith.constant 0 : index
    %c0_0 = arith.constant 0 : index
    %0 = vector.load %arg0[%c0, %c0_0] : memref<16x32xf32, #tpu.memory_space<vmem>>, vector<16x32xf32>
    %c0_1 = arith.constant 0 : index
    %c0_2 = arith.constant 0 : index
    %1 = vector.load %arg3[%c0_1, %c0_2] : memref<32x32xf32, #tpu.memory_space<vmem>>, vector<32x32xf32>
    %cst = arith.constant dense<0.000000e+00> : vector<16x32xf32>
    %2 = tpu.matmul %0, %1, %cst {dimension_numbers = #tpu.dot_dimension_numbers<[1], [0], [0], [1], [0, 0, 1, 1], [], []>} : vector<16x32xf32>, vector<32x32xf32>, vector<16x32xf32> -> vector<16x32xf32>
    %c0_3 = arith.constant 0 : index
    %c0_4 = arith.constant 0 : index
    %3 = vector.load %arg4[%c0_3, %c0_4] : memref<1x32xf32, #tpu.memory_space<vmem>>, vector<1x32xf32>
    %4 = vector.broadcast %3 : vector<1x32xf32> to vector<16x32xf32>
    %5 = arith.addf %2, %4 : vector<16x32xf32>
    %c0_5 = arith.constant 0 : index
    %c0_6 = arith.constant 0 : index
    %6 = vector.load %arg2[%c0_5, %c0_6] : memref<32x32xf32, #tpu.memory_space<vmem>>, vector<32x32xf32>
    %c0_7 = arith.constant 0 : index
    %c0_8 = arith.constant 0 : index
    %7 = vector.load %arg7[%c0_7, %c0_8] : memref<32x32xf32, #tpu.memory_space<vmem>>, vector<32x32xf32>
    %cst_9 = arith.constant dense<0.000000e+00> : vector<32x32xf32>
    %8 = tpu.matmul %6, %7, %cst_9 {dimension_numbers = #tpu.dot_dimension_numbers<[1], [0], [0], [1], [0, 0, 1, 1], [], []>} : vector<32x32xf32>, vector<32x32xf32>, vector<32x32xf32> -> vector<32x32xf32>
    %c0_10 = arith.constant 0 : index
    %c0_11 = arith.constant 0 : index
    %9 = vector.load %arg8[%c0_10, %c0_11] : memref<1x32xf32, #tpu.memory_space<vmem>>, vector<1x32xf32>
    %10 = vector.broadcast %9 : vector<1x32xf32> to vector<32x32xf32>
    %11 = arith.addf %8, %10 : vector<32x32xf32>
    %c0_12 = arith.constant 0 : index
    %c0_13 = arith.constant 0 : index
    %12 = vector.load %arg5[%c0_12, %c0_13] : memref<32x32xf32, #tpu.memory_space<vmem>>, vector<32x32xf32>
    %c0_14 = arith.constant 0 : index
    %c0_15 = arith.constant 0 : index
    %13 = vector.load %arg1[%c0_14, %c0_15] : memref<32x32xf32, #tpu.memory_space<vmem>>, vector<32x32xf32>
    %cst_16 = arith.constant dense<0.000000e+00> : vector<32x32xf32>
    %14 = tpu.matmul %12, %13, %cst_16 {dimension_numbers = #tpu.dot_dimension_numbers<[1], [1], [0], [0], [0, 0, 1, 0], [], []>} : vector<32x32xf32>, vector<32x32xf32>, vector<32x32xf32> -> vector<32x32xf32>
    %c0_17 = arith.constant 0 : index
    %c0_18 = arith.constant 0 : index
    %15 = vector.load %arg6[%c0_17, %c0_18] : memref<32x1xf32, #tpu.memory_space<vmem>>, vector<32x1xf32>
    %16 = vector.broadcast %15 : vector<32x1xf32> to vector<32x32xf32>
    %17 = arith.addf %14, %16 : vector<32x32xf32>
    %18 = tpu.concatenate %17, %17, %17, %17 in 1 : vector<32x32xf32>, vector<32x32xf32>, vector<32x32xf32>, vector<32x32xf32> -> vector<32x128xf32>
    %c0_19 = arith.constant 0 : index
    %c0_20 = arith.constant 0 : index
    %19 = vector.load %arg11[%c0_19, %c0_20] : memref<32x128xf32, #tpu.memory_space<vmem>>, vector<32x128xf32>
    %20 = arith.mulf %18, %19 : vector<32x128xf32>
    %21 = tpu.concatenate %11, %11, %11, %11 in 0 : vector<32x32xf32>, vector<32x32xf32>, vector<32x32xf32>, vector<32x32xf32> -> vector<128x32xf32>
    %c0_21 = arith.constant 0 : index
    %c0_22 = arith.constant 0 : index
    %22 = vector.load %arg12[%c0_21, %c0_22] : memref<128x32xf32, #tpu.memory_space<vmem>>, vector<128x32xf32>
    %23 = arith.mulf %21, %22 : vector<128x32xf32>
    %cst_23 = arith.constant dense<0.000000e+00> : vector<16x128xf32>
    %24 = tpu.matmul %5, %20, %cst_23 {dimension_numbers = #tpu.dot_dimension_numbers<[1], [0], [0], [1], [0, 0, 1, 1], [], []>} : vector<16x32xf32>, vector<32x128xf32>, vector<16x128xf32> -> vector<16x128xf32>
    %cst_24 = arith.constant dense<0xFF800000> : vector<16xf32>
    %25 = vector.multi_reduction <maximumf>, %24, %cst_24 [1] : vector<16x128xf32> to vector<16xf32>
    %26 = vector.shape_cast %25 : vector<16xf32> to vector<16x1xf32>
    %27 = vector.broadcast %26 : vector<16x1xf32> to vector<16x128xf32>
    %28 = arith.subf %24, %27 : vector<16x128xf32>
    %29 = math.exp %28 : vector<16x128xf32>
    %c0_25 = arith.constant 0 : index
    %c0_26 = arith.constant 0 : index
    %30 = vector.load %arg13[%c0_25, %c0_26] : memref<16x128xf32, #tpu.memory_space<vmem>>, vector<16x128xf32>
    %31 = arith.mulf %29, %30 : vector<16x128xf32>
    %c0_27 = arith.constant 0 : index
    %c0_28 = arith.constant 0 : index
    %32 = vector.load %arg12[%c0_27, %c0_28] : memref<128x32xf32, #tpu.memory_space<vmem>>, vector<128x32xf32>
    %cst_29 = arith.constant dense<0.000000e+00> : vector<16x32xf32>
    %33 = tpu.matmul %31, %32, %cst_29 {dimension_numbers = #tpu.dot_dimension_numbers<[1], [0], [0], [1], [0, 0, 1, 1], [], []>} : vector<16x128xf32>, vector<128x32xf32>, vector<16x32xf32> -> vector<16x32xf32>
    %34 = tpu.reciprocal %33 {approx = true} : vector<16x32xf32> -> vector<16x32xf32>
    %cst_30 = arith.constant dense<0.000000e+00> : vector<16x32xf32>
    %35 = tpu.matmul %31, %23, %cst_30 {dimension_numbers = #tpu.dot_dimension_numbers<[1], [0], [0], [1], [0, 0, 1, 1], [], []>} : vector<16x128xf32>, vector<128x32xf32>, vector<16x32xf32> -> vector<16x32xf32>
    %36 = arith.mulf %35, %34 : vector<16x32xf32>
    %c0_31 = arith.constant 0 : index
    %c0_32 = arith.constant 0 : index
    %37 = vector.load %arg9[%c0_31, %c0_32] : memref<32x32xf32, #tpu.memory_space<vmem>>, vector<32x32xf32>
    %cst_33 = arith.constant dense<0.000000e+00> : vector<16x32xf32>
    %38 = tpu.matmul %36, %37, %cst_33 {dimension_numbers = #tpu.dot_dimension_numbers<[1], [0], [0], [1], [0, 0, 1, 1], [], []>} : vector<16x32xf32>, vector<32x32xf32>, vector<16x32xf32> -> vector<16x32xf32>
    %c0_34 = arith.constant 0 : index
    %c0_35 = arith.constant 0 : index
    %39 = vector.load %arg10[%c0_34, %c0_35] : memref<1x32xf32, #tpu.memory_space<vmem>>, vector<1x32xf32>
    %40 = vector.broadcast %39 : vector<1x32xf32> to vector<16x32xf32>
    %41 = arith.addf %38, %40 : vector<16x32xf32>
    %c0_36 = arith.constant 0 : index
    %c0_37 = arith.constant 0 : index
    %42 = vector.load %arg14[%c0_36, %c0_37] : memref<16x32xf32, #tpu.memory_space<vmem>>, vector<16x32xf32>
    tpu.vector_store %arg14[%c0_36, %c0_37], %41 {strides = array<i32>} : memref<16x32xf32, #tpu.memory_space<vmem>>, vector<16x32xf32>,
    return
  }
}

</mosaic_0001>

<llo_original>
// kernel: _lambda_.1
$region0: #{_lambda_.1}
  #allocation0 [shape = 'u32[]', space=smem, size = 0x4, offset = 0x4, fixed_abs, tag = 'smem constant byte address 0x4 - core index']
  #allocation1 [shape = 'u32[144,128]{1,0:T(1,128)}', space=vmem, size = 0x12000, scoped, tag = 'internal scratch']
  %s0 = inlined_call_operand.hbm [shape: f32[16,32], index: 0, kind: input, shape index: {}]
  %s1 = inlined_call_operand.hbm [shape: f32[32,32], index: 1, kind: input, shape index: {}]
  %s2 = inlined_call_operand.hbm [shape: f32[32,32], index: 2, kind: input, shape index: {}]
  %s3 = inlined_call_operand.hbm [shape: f32[32,32], index: 3, kind: input, shape index: {}]
  %s4 = inlined_call_operand.vmem [shape: f32[1,32], index: 4, kind: input, shape index: {}]
  %s5 = inlined_call_operand.hbm [shape: f32[32,32], index: 5, kind: input, shape index: {}]
  %s6 = inlined_call_operand.hbm [shape: f32[32,1], index: 6, kind: input, shape index: {}]
  %s7 = inlined_call_operand.hbm [shape: f32[32,32], index: 7, kind: input, shape index: {}]
  %s8 = inlined_call_operand.vmem [shape: f32[1,32], index: 8, kind: input, shape index: {}]
  %s9 = inlined_call_operand.hbm [shape: f32[32,32], index: 9, kind: input, shape index: {}]
  %s10 = inlined_call_operand.vmem [shape: f32[1,32], index: 10, kind: input, shape index: {}]
  %s11 = inlined_call_operand.vmem [shape: f32[32,128], index: 11, kind: input, shape index: {}]
  %s12 = inlined_call_operand.hbm [shape: f32[128,32], index: 12, kind: input, shape index: {}]
  %s13 = inlined_call_operand.vmem [shape: f32[16,128], index: 13, kind: input, shape index: {}]
  %s14 = inlined_call_operand.hbm [shape: f32[16,32], index: 14, kind: output, shape index: {}]
  %s15 = sld [smem:[#allocation0]]
  $region102: #{_lambda_.1} parent=0
    _
  %s17 = ssub.s32 1, %s15
  %s18 = scalar_select 0, %s17, %s15
  $region1: #{_lambda_.1} parent=0
    #allocation2 [shape = 'u8[8192]{0}', space=vmem, size = 0x2000, scoped, tag = 'input window, operand 0, single buffered']
    #allocation3 [shape = 's32[1]{0}', space=sflag, size = 0x4, scoped, tag = 'scoped memory for _lambda_.1']
    #allocation4 [shape = 's32[1]{0}', space=sflag, size = 0x4, scoped, tag = 'scoped memory for _lambda_.1']
    #allocation5 [shape = 'u8[16384]{0}', space=vmem, size = 0x4000, scoped, tag = 'input window, operand 1, single buffered']
    #allocation6 [shape = 's32[1]{0}', space=sflag, size = 0x4, scoped, tag = 'scoped memory for _lambda_.1']
    #allocation7 [shape = 'u8[16384]{0}', space=vmem, size = 0x4000, scoped, tag = 'input window, operand 2, single buffered']
    #allocation8 [shape = 'u8[16384]{0}', space=vmem, size = 0x4000, scoped, tag = 'input window, operand 3, single buffered']
    #allocation9 [shape = 's32[1]{0}', space=sflag, size = 0x4, scoped, tag = 'scoped memory for _lambda_.1']
    #allocation10 [shape = 'u8[16384]{0}', space=vmem, size = 0x4000, scoped, tag = 'input window, operand 5, single buffered']
    #allocation11 [shape = 'u8[16384]{0}', space=vmem, size = 0x4000, scoped, tag = 'input window, operand 6, single buffered']
    #allocation12 [shape = 's32[1]{0}', space=sflag, size = 0x4, scoped, tag = 'scoped memory for _lambda_.1']
    #allocation13 [shape = 'u8[16384]{0}', space=vmem, size = 0x4000, scoped, tag = 'input window, operand 7, single buffered']
    #allocation14 [shape = 'u8[16384]{0}', space=vmem, size = 0x4000, scoped, tag = 'input window, operand 9, single buffered']
    #allocation15 [shape = 's32[1]{0}', space=sflag, size = 0x4, scoped, tag = 'scoped memory for _lambda_.1']
    #allocation16 [shape = 'u8[65536]{0}', space=vmem, size = 0x10000, scoped, tag = 'input window, operand 12, single buffered']
    #allocation17 [shape = 'u8[8192]{0}', space=vmem, size = 0x2000, scoped, tag = 'output window, operand 0, single buffered']
    %19 = vsyncpa [#allocation3], 0
    %20 = vsyncpa [#allocation6], 0
    %21 = vsyncpa [#allocation9], 0
    %22 = vsyncpa [#allocation12], 0
    %23 = vsyncpa [#allocation15], 0
    %24 = vsyncpa [#allocation4], 0
    // Predicated region
    $region2: #{_lambda_.1} parent=1 // pred_check
      _
    $region3: #{_lambda_.1} parent=1 // pred_check_branch
      %26 = sbr.rel (0) target = $region5
    $region4: #{_lambda_.1} parent=1 // pred_region
      %s28 = ssub.s32 256, 256
      %29 = vsyncadd [#allocation3], %s28
      %s30 = sshll.u32 [#allocation2], 4
      %s31 = int_to_ptr.vmem [resolvable:$true] %s30
      %36 = dma.hbm_to_vmem [thread:$0]  %s0, 256, %s31, [#allocation3], 128, 128, 8
    $region5: #{_lambda_.1} parent=1 // pred_fallthru
      _
    // Predicated region
    $region6: #{_lambda_.1} parent=1 // pred_check
      _
    $region7: #{_lambda_.1} parent=1 // pred_check_branch
      %38 = sbr.rel (0) target = $region9
    $region8: #{_lambda_.1} parent=1 // pred_region
      %s40 = ssub.s32 512, 512
      %41 = vsyncadd [#allocation6], %s40
      %s42 = sshll.u32 [#allocation5], 4
      %s43 = int_to_ptr.vmem [resolvable:$true] %s42
      %48 = dma.hbm_to_vmem [thread:$0]  %s1, 512, %s43, [#allocation6], 128, 128, 8
    $region9: #{_lambda_.1} parent=1 // pred_fallthru
      _
    // Predicated region
    $region10: #{_lambda_.1} parent=1 // pred_check
      _
    $region11: #{_lambda_.1} parent=1 // pred_check_branch
      %50 = sbr.rel (0) target = $region13
    $region12: #{_lambda_.1} parent=1 // pred_region
      %s52 = ssub.s32 512, 512
      %53 = vsyncadd [#allocation6], %s52
      %s54 = sshll.u32 [#allocation7], 4
      %s55 = int_to_ptr.vmem [resolvable:$true] %s54
      %60 = dma.hbm_to_vmem [thread:$0]  %s2, 512, %s55, [#allocation6], 128, 128, 8
    $region13: #{_lambda_.1} parent=1 // pred_fallthru
      _
    // Predicated region
    $region14: #{_lambda_.1} parent=1 // pred_check
      _
    $region15: #{_lambda_.1} parent=1 // pred_check_branch
      %62 = sbr.rel (0) target = $region17
    $region16: #{_lambda_.1} parent=1 // pred_region
      %s64 = ssub.s32 512, 512
      %65 = vsyncadd [#allocation9], %s64
      %s66 = sshll.u32 [#allocation8], 4
      %s67 = int_to_ptr.vmem [resolvable:$true] %s66
      %72 = dma.hbm_to_vmem [thread:$0]  %s3, 512, %s67, [#allocation9], 128, 128, 8
    $region17: #{_lambda_.1} parent=1 // pred_fallthru
      _
    // Predicated region
    $region18: #{_lambda_.1} parent=1 // pred_check
      _
    $region19: #{_lambda_.1} parent=1 // pred_check_branch
      %74 = sbr.rel (0) target = $region21
    $region20: #{_lambda_.1} parent=1 // pred_region
      _
    $region21: #{_lambda_.1} parent=1 // pred_fallthru
      _
    // Predicated region
    $region22: #{_lambda_.1} parent=1 // pred_check
      _
    $region23: #{_lambda_.1} parent=1 // pred_check_branch
      %76 = sbr.rel (0) target = $region25
    $region24: #{_lambda_.1} parent=1 // pred_region
      %s78 = ssub.s32 512, 512
      %79 = vsyncadd [#allocation9], %s78
      %s80 = sshll.u32 [#allocation10], 4
      %s81 = int_to_ptr.vmem [resolvable:$true] %s80
      %86 = dma.hbm_to_vmem [thread:$0]  %s5, 512, %s81, [#allocation9], 128, 128, 8
    $region25: #{_lambda_.1} parent=1 // pred_fallthru
      _
    // Predicated region
    $region26: #{_lambda_.1} parent=1 // pred_check
      _
    $region27: #{_lambda_.1} parent=1 // pred_check_branch
      %88 = sbr.rel (0) target = $region29
    $region28: #{_lambda_.1} parent=1 // pred_region
      %s90 = ssub.s32 512, 512
      %91 = vsyncadd [#allocation12], %s90
      %s92 = sshll.u32 [#allocation11], 4
      %s93 = int_to_ptr.vmem [resolvable:$true] %s92
      %98 = dma.hbm_to_vmem [thread:$0]  %s6, 512, %s93, [#allocation12], 128, 128, 8
    $region29: #{_lambda_.1} parent=1 // pred_fallthru
      _
    // Predicated region
    $region30: #{_lambda_.1} parent=1 // pred_check
      _
    $region31: #{_lambda_.1} parent=1 // pred_check_branch
      %100 = sbr.rel (0) target = $region33
    $region32: #{_lambda_.1} parent=1 // pred_region
      %s102 = ssub.s32 512, 512
      %103 = vsyncadd [#allocation12], %s102
      %s104 = sshll.u32 [#allocation13], 4
      %s105 = int_to_ptr.vmem [resolvable:$true] %s104
      %110 = dma.hbm_to_vmem [thread:$0]  %s7, 512, %s105, [#allocation12], 128, 128, 8
    $region33: #{_lambda_.1} parent=1 // pred_fallthru
      _
    // Predicated region
    $region34: #{_lambda_.1} parent=1 // pred_check
      _
    $region35: #{_lambda_.1} parent=1 // pred_check_branch
      %112 = sbr.rel (0) target = $region37
    $region36: #{_lambda_.1} parent=1 // pred_region
      _
    $region37: #{_lambda_.1} parent=1 // pred_fallthru
      _
    // Predicated region
    $region38: #{_lambda_.1} parent=1 // pred_check
      _
    $region39: #{_lambda_.1} parent=1 // pred_check_branch
      %114 = sbr.rel (0) target = $region41
    $region40: #{_lambda_.1} parent=1 // pred_region
      %s116 = ssub.s32 512, 512
      %117 = vsyncadd [#allocation15], %s116
      %s118 = sshll.u32 [#allocation14], 4
      %s119 = int_to_ptr.vmem [resolvable:$true] %s118
      %124 = dma.hbm_to_vmem [thread:$0]  %s9, 512, %s119, [#allocation15], 128, 128, 8
    $region41: #{_lambda_.1} parent=1 // pred_fallthru
      _
    // Predicated region
    $region42: #{_lambda_.1} parent=1 // pred_check
      _
    $region43: #{_lambda_.1} parent=1 // pred_check_branch
      %126 = sbr.rel (0) target = $region45
    $region44: #{_lambda_.1} parent=1 // pred_region
      _
    $region45: #{_lambda_.1} parent=1 // pred_fallthru
      _
    // Predicated region
    $region46: #{_lambda_.1} parent=1 // pred_check
      _
    $region47: #{_lambda_.1} parent=1 // pred_check_branch
      %128 = sbr.rel (0) target = $region49
    $region48: #{_lambda_.1} parent=1 // pred_region
      _
    $region49: #{_lambda_.1} parent=1 // pred_fallthru
      _
    // Predicated region
    $region50: #{_lambda_.1} parent=1 // pred_check
      _
    $region51: #{_lambda_.1} parent=1 // pred_check_branch
      %130 = sbr.rel (0) target = $region53
    $region52: #{_lambda_.1} parent=1 // pred_region
      %s132 = ssub.s32 2048, 2048
      %133 = vsyncadd [#allocation15], %s132
      %s134 = sshll.u32 [#allocation16], 4
      %s135 = int_to_ptr.vmem [resolvable:$true] %s134
      %140 = dma.hbm_to_vmem [thread:$0]  %s12, 2048, %s135, [#allocation15], 128, 128, 8
    $region53: #{_lambda_.1} parent=1 // pred_fallthru
      _
    // Predicated region
    $region54: #{_lambda_.1} parent=1 // pred_check
      _
    $region55: #{_lambda_.1} parent=1 // pred_check_branch
      %142 = sbr.rel (0) target = $region57
    $region56: #{_lambda_.1} parent=1 // pred_region
      _
    $region57: #{_lambda_.1} parent=1 // pred_fallthru
      _
    // Predicated region
    $region58: #{_lambda_.1} parent=1 // pred_check
      _
    $region59: #{_lambda_.1} parent=1 // pred_check_branch
      %144 = sbr.rel (0) target = $region61
    $region60: #{_lambda_.1} parent=1 // pred_region
      %145 = dma.done [#allocation3], 256
    $region61: #{_lambda_.1} parent=1 // pred_fallthru
      _
    // Predicated region
    $region62: #{_lambda_.1} parent=1 // pred_check
      _
    $region63: #{_lambda_.1} parent=1 // pred_check_branch
      %147 = sbr.rel (0) target = $region65
    $region64: #{_lambda_.1} parent=1 // pred_region
      %148 = dma.done [#allocation6], 512
    $region65: #{_lambda_.1} parent=1 // pred_fallthru
      _
    // Predicated region
    $region66: #{_lambda_.1} parent=1 // pred_check
      _
    $region67: #{_lambda_.1} parent=1 // pred_check_branch
      %150 = sbr.rel (0) target = $region69
    $region68: #{_lambda_.1} parent=1 // pred_region
      %151 = dma.done [#allocation6], 512
    $region69: #{_lambda_.1} parent=1 // pred_fallthru
      _
    // Predicated region
    $region70: #{_lambda_.1} parent=1 // pred_check
      _
    $region71: #{_lambda_.1} parent=1 // pred_check_branch
      %153 = sbr.rel (0) target = $region73
    $region72: #{_lambda_.1} parent=1 // pred_region
      %154 = dma.done [#allocation9], 512
    $region73: #{_lambda_.1} parent=1 // pred_fallthru
      _
    // Predicated region
    $region74: #{_lambda_.1} parent=1 // pred_check
      _
    $region75: #{_lambda_.1} parent=1 // pred_check_branch
      %156 = sbr.rel (0) target = $region77
    $region76: #{_lambda_.1} parent=1 // pred_region
      %157 = dma.done [#allocation9], 512
    $region77: #{_lambda_.1} parent=1 // pred_fallthru
      _
    // Predicated region
    $region78: #{_lambda_.1} parent=1 // pred_check
      _
    $region79: #{_lambda_.1} parent=1 // pred_check_branch
      %159 = sbr.rel (0) target = $region81
    $region80: #{_lambda_.1} parent=1 // pred_region
      %160 = dma.done [#allocation12], 512
    $region81: #{_lambda_.1} parent=1 // pred_fallthru
      _
    // Predicated region
    $region82: #{_lambda_.1} parent=1 // pred_check
      _
    $region83: #{_lambda_.1} parent=1 // pred_check_branch
      %162 = sbr.rel (0) target = $region85
    $region84: #{_lambda_.1} parent=1 // pred_region
      %163 = dma.done [#allocation12], 512
    $region85: #{_lambda_.1} parent=1 // pred_fallthru
      _
    // Predicated region
    $region86: #{_lambda_.1} parent=1 // pred_check
      _
    $region87: #{_lambda_.1} parent=1 // pred_check_branch
      %165 = sbr.rel (0) target = $region89
    $region88: #{_lambda_.1} parent=1 // pred_region
      %166 = dma.done [#allocation15], 512
    $region89: #{_lambda_.1} parent=1 // pred_fallthru
      _
    // Predicated region
    $region90: #{_lambda_.1} parent=1 // pred_check
      _
    $region91: #{_lambda_.1} parent=1 // pred_check_branch
      %168 = sbr.rel (0) target = $region93
    $region92: #{_lambda_.1} parent=1 // pred_region
      %169 = dma.done [#allocation15], 2048
    $region93: #{_lambda_.1} parent=1 // pred_fallthru
      _
    %v170 = vld [vmem:[#allocation2] sm:$0xff]
    %v171 = vld [vmem:[#allocation2 + $0x8] sm:$0xff]
    %v172 = vld [vmem:[#allocation8] sm:$0xff]
    %v173 = vld [vmem:[#allocation8 + $0x8] sm:$0xff]
    %v174 = vld [vmem:[#allocation8 + $0x10] sm:$0xff]
    %v175 = vld [vmem:[#allocation8 + $0x18] sm:$0xff]
    %v176 = vld [vmem:[%s4] sm:$0x1]
    %v178 = vlaneseq
    %v179 = vshrl.u32 %v178, 7
    %v180 = vsub.s32 0, %v179
    %v181 = vrot.slane %v176, %v180
    %vm183 = vcmask 261120
    %v185 = vsel %vm183, %v170, 0
    %v188 = vsel %vm183, %v171, 0
    %190 = vmatprep.subr.mxu0 0.0
    %191 = vmatpush1.msra.mxu0 %v172
    %192 = vmatprep.subr.mxu0 0.0
    %193 = vmatpush1.msra.mxu0 %v173
    %194 = vmatprep.subr.mxu0 0.0
    %195 = vmatpush1.msra.mxu0 %v174
    %196 = vmatprep.subr.mxu0 0.0
    %197 = vmatpush1.msra.mxu0 %v175
    %198 = vmatprep.subr.mxu0 0.0
    %199 = vmatpush1.msra.mxu0 0.0
    %200 = vmatprep.subr.mxu0 0.0
    %201 = vmatpush1.msra.mxu0 0.0
    %202 = vmatprep.subr.mxu0 0.0
    %203 = vmatpush1.msra.mxu0 0.0
    %204 = vmatprep.subr.mxu0 0.0
    %205 = vmatpush1.msra.mxu0 0.0
    %206 = vmatprep.subr.mxu0 0.0
    %207 = vmatpush1.msra.mxu0 0.0
    %208 = vmatprep.subr.mxu0 0.0
    %209 = vmatpush1.msra.mxu0 0.0
    %210 = vmatprep.subr.mxu0 0.0
    %211 = vmatpush1.msra.mxu0 0.0
    %212 = vmatprep.subr.mxu0 0.0
    %213 = vmatpush1.msra.mxu0 0.0
    %214 = vmatprep.subr.mxu0 0.0
    %215 = vmatpush1.msra.mxu0 0.0
    %216 = vmatprep.subr.mxu0 0.0
    %217 = vmatpush1.msra.mxu0 0.0
    %218 = vmatprep.subr.mxu0 0.0
    %219 = vmatpush1.msra.mxu0 0.0
    %220 = vmatprep.subr.mxu0 0.0
    %221 = vmatpush1.msra.mxu0 0.0
    %222 = vmatprep.subr.mxu0 0.0
    %223 = vmatpush1.msra.mxu0 0.0
    %224 = vmatprep.subr.mxu0 0.0
    %225 = vmatpush1.msra.mxu0 0.0
    %226 = vmatprep.subr.mxu0 0.0
    %227 = vmatpush1.msra.mxu0 0.0
    %228 = vmatprep.subr.mxu0 0.0
    %229 = vmatpush1.msra.mxu0 0.0
    %230 = vmatprep.subr.mxu0 0.0
    %231 = vmatpush1.msra.mxu0 0.0
    %232 = vmatprep.subr.mxu0 0.0
    %233 = vmatpush1.msra.mxu0 0.0
    %234 = vmatprep.subr.mxu0 0.0
    %235 = vmatpush1.msra.mxu0 0.0
    %236 = vmatprep.subr.mxu0 0.0
    %237 = vmatpush1.msra.mxu0 0.0
    %238 = vmatprep.subr.mxu0 0.0
    %239 = vmatpush1.msra.mxu0 0.0
    %240 = vmatprep.subr.mxu0 0.0
    %241 = vmatpush1.msra.mxu0 0.0
    %242 = vmatprep.subr.mxu0 0.0
    %243 = vmatpush1.msra.mxu0 0.0
    %244 = vmatprep.subr.mxu0 0.0
    %245 = vmatpush1.msra.mxu0 0.0
    %246 = vmatprep.subr.mxu0 0.0
    %247 = vmatpush1.msra.mxu0 0.0
    %248 = vmatprep.subr.mxu0 0.0
    %249 = vmatpush1.msra.mxu0 0.0
    %250 = vmatprep.subr.mxu0 0.0
    %251 = vmatpush1.msra.mxu0 0.0
    %252 = vmatprep.subr.mxu0 0.0
    %253 = vmatpush1.msra.mxu0 0.0
    %254 = vmatprep.mubr.f32.mxu0 0.0
    %255 = vmatmul.mubr.f32.gmra.mrb[0].mxu0 %v185
    %v256 = vpop.f32.mrb[0].mxu0
    %v257 = vadd.f32 %v181, %v256
    %v258 = vpop.f32.mrb[0].mxu0
    %259 = vmatprep.mubr.f32.mxu0 0.0
    %260 = vmatmul.mubr.f32.gmra.mrb[0].mxu0 %v188
    %v261 = vpop.f32.mrb[0].mxu0
    %v262 = vadd.f32 %v181, %v261
    %v263 = vpop.f32.mrb[0].mxu0
    %264 = vdwg.mxu0
    %v265 = vld [vmem:[#allocation7] sm:$0xff]
    %v266 = vld [vmem:[#allocation7 + $0x8] sm:$0xff]
    %v267 = vld [vmem:[#allocation7 + $0x10] sm:$0xff]
    %v268 = vld [vmem:[#allocation7 + $0x18] sm:$0xff]
    %v269 = vld [vmem:[#allocation13] sm:$0xff]
    %v270 = vld [vmem:[#allocation13 + $0x8] sm:$0xff]
    %v271 = vld [vmem:[#allocation13 + $0x10] sm:$0xff]
    %v272 = vld [vmem:[#allocation13 + $0x18] sm:$0xff]
    %v273 = vld [vmem:[%s8] sm:$0x1]
    %v275 = vlaneseq
    %v276 = vshrl.u32 %v275, 7
    %v277 = vsub.s32 0, %v276
    %v278 = vrot.slane %v273, %v277
    %v281 = vsel %vm183, %v265, 0
    %v284 = vsel %vm183, %v266, 0
    %v287 = vsel %vm183, %v267, 0
    %v290 = vsel %vm183, %v268, 0
    %292 = vmatprep.subr.mxu0 0.0
    %293 = vmatpush1.msra.mxu0 %v269
    %294 = vmatprep.subr.mxu0 0.0
    %295 = vmatpush1.msra.mxu0 %v270
    %296 = vmatprep.subr.mxu0 0.0
    %297 = vmatpush1.msra.mxu0 %v271
    %298 = vmatprep.subr.mxu0 0.0
    %299 = vmatpush1.msra.mxu0 %v272
    %300 = vmatprep.subr.mxu0 0.0
    %301 = vmatpush1.msra.mxu0 0.0
    %302 = vmatprep.subr.mxu0 0.0
    %303 = vmatpush1.msra.mxu0 0.0
    %304 = vmatprep.subr.mxu0 0.0
    %305 = vmatpush1.msra.mxu0 0.0
    %306 = vmatprep.subr.mxu0 0.0
    %307 = vmatpush1.msra.mxu0 0.0
    %308 = vmatprep.subr.mxu0 0.0
    %309 = vmatpush1.msra.mxu0 0.0
    %310 = vmatprep.subr.mxu0 0.0
    %311 = vmatpush1.msra.mxu0 0.0
    %312 = vmatprep.subr.mxu0 0.0
    %313 = vmatpush1.msra.mxu0 0.0
    %314 = vmatprep.subr.mxu0 0.0
    %315 = vmatpush1.msra.mxu0 0.0
    %316 = vmatprep.subr.mxu0 0.0
    %317 = vmatpush1.msra.mxu0 0.0
    %318 = vmatprep.subr.mxu0 0.0
    %319 = vmatpush1.msra.mxu0 0.0
    %320 = vmatprep.subr.mxu0 0.0
    %321 = vmatpush1.msra.mxu0 0.0
    %322 = vmatprep.subr.mxu0 0.0
    %323 = vmatpush1.msra.mxu0 0.0
    %324 = vmatprep.subr.mxu0 0.0
    %325 = vmatpush1.msra.mxu0 0.0
    %326 = vmatprep.subr.mxu0 0.0
    %327 = vmatpush1.msra.mxu0 0.0
    %328 = vmatprep.subr.mxu0 0.0
    %329 = vmatpush1.msra.mxu0 0.0
    %330 = vmatprep.subr.mxu0 0.0
    %331 = vmatpush1.msra.mxu0 0.0
    %332 = vmatprep.subr.mxu0 0.0
    %333 = vmatpush1.msra.mxu0 0.0
    %334 = vmatprep.subr.mxu0 0.0
    %335 = vmatpush1.msra.mxu0 0.0
    %336 = vmatprep.subr.mxu0 0.0
    %337 = vmatpush1.msra.mxu0 0.0
    %338 = vmatprep.subr.mxu0 0.0
    %339 = vmatpush1.msra.mxu0 0.0
    %340 = vmatprep.subr.mxu0 0.0
    %341 = vmatpush1.msra.mxu0 0.0
    %342 = vmatprep.subr.mxu0 0.0
    %343 = vmatpush1.msra.mxu0 0.0
    %344 = vmatprep.subr.mxu0 0.0
    %345 = vmatpush1.msra.mxu0 0.0
    %346 = vmatprep.subr.mxu0 0.0
    %347 = vmatpush1.msra.mxu0 0.0
    %348 = vmatprep.subr.mxu0 0.0
    %349 = vmatpush1.msra.mxu0 0.0
    %350 = vmatprep.subr.mxu0 0.0
    %351 = vmatpush1.msra.mxu0 0.0
    %352 = vmatprep.subr.mxu0 0.0
    %353 = vmatpush1.msra.mxu0 0.0
    %354 = vmatprep.subr.mxu0 0.0
    %355 = vmatpush1.msra.mxu0 0.0
    %356 = vmatprep.mubr.f32.mxu0 0.0
    %357 = vmatmul.mubr.f32.gmra.mrb[0].mxu0 %v281
    %v358 = vpop.f32.mrb[0].mxu0
    %v359 = vadd.f32 %v278, %v358
    %v360 = vpop.f32.mrb[0].mxu0
    %361 = vmatprep.mubr.f32.mxu0 0.0
    %362 = vmatmul.mubr.f32.gmra.mrb[0].mxu0 %v284
    %v363 = vpop.f32.mrb[0].mxu0
    %v364 = vadd.f32 %v278, %v363
    %v365 = vpop.f32.mrb[0].mxu0
    %366 = vmatprep.mubr.f32.mxu0 0.0
    %367 = vmatmul.mubr.f32.gmra.mrb[0].mxu0 %v287
    %v368 = vpop.f32.mrb[0].mxu0
    %v369 = vadd.f32 %v278, %v368
    %v370 = vpop.f32.mrb[0].mxu0
    %371 = vmatprep.mubr.f32.mxu0 0.0
    %372 = vmatmul.mubr.f32.gmra.mrb[0].mxu0 %v290
    %v373 = vpop.f32.mrb[0].mxu0
    %v374 = vadd.f32 %v278, %v373
    %v375 = vpop.f32.mrb[0].mxu0
    %376 = vdwg.mxu0
    %v377 = vld [vmem:[#allocation10] sm:$0xff]
    %v378 = vld [vmem:[#allocation10 + $0x8] sm:$0xff]
    %v379 = vld [vmem:[#allocation10 + $0x10] sm:$0xff]
    %v380 = vld [vmem:[#allocation10 + $0x18] sm:$0xff]
    %v381 = vld [vmem:[#allocation5] sm:$0xff]
    %v382 = vld [vmem:[#allocation5 + $0x8] sm:$0xff]
    %v383 = vld [vmem:[#allocation5 + $0x10] sm:$0xff]
    %v384 = vld [vmem:[#allocation5 + $0x18] sm:$0xff]
    %v385 = vld [vmem:[#allocation11] sm:$0xff]
    %v386 = vld [vmem:[#allocation11 + $0x8] sm:$0xff]
    %v387 = vld [vmem:[#allocation11 + $0x10] sm:$0xff]
    %v388 = vld [vmem:[#allocation11 + $0x18] sm:$0xff]
    %390 = vset.pattern.permute.xlu0 0
    %391 = vperm.xlu0 %390, %v385
    %v392 = vpop.permute.xlu0 %391
    %395 = vset.pattern.permute.xlu0 0
    %396 = vperm.xlu0 %395, %v386
    %v397 = vpop.permute.xlu0 %396
    %400 = vset.pattern.permute.xlu0 0
    %401 = vperm.xlu0 %400, %v387
    %v402 = vpop.permute.xlu0 %401
    %405 = vset.pattern.permute.xlu0 0
    %406 = vperm.xlu0 %405, %v388
    %v407 = vpop.permute.xlu0 %406
    %v410 = vsel %vm183, %v377, 0
    %v413 = vsel %vm183, %v378, 0
    %v416 = vsel %vm183, %v379, 0
    %v419 = vsel %vm183, %v380, 0
    %v422 = vsel %vm183, %v381, 0
    %v425 = vsel %vm183, %v382, 0
    %v428 = vsel %vm183, %v383, 0
    %v431 = vsel %vm183, %v384, 0
    %433 = vmatprep.subr.mxu0 0.0
    %434 = vmatpush1.xpose.msra.mxu0 %v422
    %435 = vmatprep.subr.mxu0 0.0
    %436 = vmatpush1.xpose.msra.mxu0 %v425
    %437 = vmatprep.subr.mxu0 0.0
    %438 = vmatpush1.xpose.msra.mxu0 %v428
    %439 = vmatprep.subr.mxu0 0.0
    %440 = vmatpush1.xpose.msra.mxu0 %v431
    %441 = vmatprep.subr.mxu0 0.0
    %442 = vmatpush1.xpose.msra.mxu0 0.0
    %443 = vmatprep.subr.mxu0 0.0
    %444 = vmatpush1.xpose.msra.mxu0 0.0
    %445 = vmatprep.subr.mxu0 0.0
    %446 = vmatpush1.xpose.msra.mxu0 0.0
    %447 = vmatprep.subr.mxu0 0.0
    %448 = vmatpush1.xpose.msra.mxu0 0.0
    %449 = vmatprep.subr.mxu0 0.0
    %450 = vmatpush1.xpose.msra.mxu0 0.0
    %451 = vmatprep.subr.mxu0 0.0
    %452 = vmatpush1.xpose.msra.mxu0 0.0
    %453 = vmatprep.subr.mxu0 0.0
    %454 = vmatpush1.xpose.msra.mxu0 0.0
    %455 = vmatprep.subr.mxu0 0.0
    %456 = vmatpush1.xpose.msra.mxu0 0.0
    %457 = vmatprep.subr.mxu0 0.0
    %458 = vmatpush1.xpose.msra.mxu0 0.0
    %459 = vmatprep.subr.mxu0 0.0
    %460 = vmatpush1.xpose.msra.mxu0 0.0
    %461 = vmatprep.subr.mxu0 0.0
    %462 = vmatpush1.xpose.msra.mxu0 0.0
    %463 = vmatprep.subr.mxu0 0.0
    %464 = vmatpush1.xpose.msra.mxu0 0.0
    %465 = vmatprep.subr.mxu0 0.0
    %466 = vmatpush1.xpose.msra.mxu0 0.0
    %467 = vmatprep.subr.mxu0 0.0
    %468 = vmatpush1.xpose.msra.mxu0 0.0
    %469 = vmatprep.subr.mxu0 0.0
    %470 = vmatpush1.xpose.msra.mxu0 0.0
    %471 = vmatprep.subr.mxu0 0.0
    %472 = vmatpush1.xpose.msra.mxu0 0.0
    %473 = vmatprep.subr.mxu0 0.0
    %474 = vmatpush1.xpose.msra.mxu0 0.0
    %475 = vmatprep.subr.mxu0 0.0
    %476 = vmatpush1.xpose.msra.mxu0 0.0
    %477 = vmatprep.subr.mxu0 0.0
    %478 = vmatpush1.xpose.msra.mxu0 0.0
    %479 = vmatprep.subr.mxu0 0.0
    %480 = vmatpush1.xpose.msra.mxu0 0.0
    %481 = vmatprep.subr.mxu0 0.0
    %482 = vmatpush1.xpose.msra.mxu0 0.0
    %483 = vmatprep.subr.mxu0 0.0
    %484 = vmatpush1.xpose.msra.mxu0 0.0
    %485 = vmatprep.subr.mxu0 0.0
    %486 = vmatpush1.xpose.msra.mxu0 0.0
    %487 = vmatprep.subr.mxu0 0.0
    %488 = vmatpush1.xpose.msra.mxu0 0.0
    %489 = vmatprep.subr.mxu0 0.0
    %490 = vmatpush1.xpose.msra.mxu0 0.0
    %491 = vmatprep.subr.mxu0 0.0
    %492 = vmatpush1.xpose.msra.mxu0 0.0
    %493 = vmatprep.subr.mxu0 0.0
    %494 = vmatpush1.xpose.msra.mxu0 0.0
    %495 = vmatprep.subr.mxu0 0.0
    %496 = vmatpush1.xpose.msra.mxu0 0.0
    %497 = vmatprep.mubr.f32.mxu0 0.0
    %498 = vmatmul.mubr.f32.gmra.mrb[0].mxu0 %v410
    %v499 = vpop.f32.mrb[0].mxu0
    %v500 = vadd.f32 %v392, %v499
    %v501 = vpop.f32.mrb[0].mxu0
    %502 = vmatprep.mubr.f32.mxu0 0.0
    %503 = vmatmul.mubr.f32.gmra.mrb[0].mxu0 %v413
    %v504 = vpop.f32.mrb[0].mxu0
    %v505 = vadd.f32 %v397, %v504
    %v506 = vpop.f32.mrb[0].mxu0
    %507 = vmatprep.mubr.f32.mxu0 0.0
    %508 = vmatmul.mubr.f32.gmra.mrb[0].mxu0 %v416
    %v509 = vpop.f32.mrb[0].mxu0
    %v510 = vadd.f32 %v402, %v509
    %v511 = vpop.f32.mrb[0].mxu0
    %512 = vmatprep.mubr.f32.mxu0 0.0
    %513 = vmatmul.mubr.f32.gmra.mrb[0].mxu0 %v419
    %v514 = vpop.f32.mrb[0].mxu0
    %v515 = vadd.f32 %v407, %v514
    %v516 = vpop.f32.mrb[0].mxu0
    %517 = vdwg.mxu0
    %522 = vrot.lane.b32.xlu0 %v500, 32
    %v523 = vpop.permute.xlu0 %522
    %524 = vrot.lane.b32.xlu0 %v505, 32
    %v525 = vpop.permute.xlu0 %524
    %526 = vrot.lane.b32.xlu0 %v510, 32
    %v527 = vpop.permute.xlu0 %526
    %528 = vrot.lane.b32.xlu0 %v515, 32
    %v529 = vpop.permute.xlu0 %528
    %534 = vrot.lane.b32.xlu0 %v500, 64
    %v535 = vpop.permute.xlu0 %534
    %536 = vrot.lane.b32.xlu0 %v505, 64
    %v537 = vpop.permute.xlu0 %536
    %538 = vrot.lane.b32.xlu0 %v510, 64
    %v539 = vpop.permute.xlu0 %538
    %540 = vrot.lane.b32.xlu0 %v515, 64
    %v541 = vpop.permute.xlu0 %540
    %546 = vrot.lane.b32.xlu0 %v500, 96
    %v547 = vpop.permute.xlu0 %546
    %548 = vrot.lane.b32.xlu0 %v505, 96
    %v549 = vpop.permute.xlu0 %548
    %550 = vrot.lane.b32.xlu0 %v510, 96
    %v551 = vpop.permute.xlu0 %550
    %552 = vrot.lane.b32.xlu0 %v515, 96
    %v553 = vpop.permute.xlu0 %552
    %v558 = vsel %vm183, %v500, %v523
    %v559 = vsel %vm183, %v505, %v525
    %v560 = vsel %vm183, %v510, %v527
    %v561 = vsel %vm183, %v515, %v529
    %vm562 = vcmask 523264
    %v563 = vsel %vm562, %v558, %v535
    %v564 = vsel %vm562, %v559, %v537
    %v565 = vsel %vm562, %v560, %v539
    %v566 = vsel %vm562, %v561, %v541
    %vm567 = vcmask 785408
    %v568 = vsel %vm567, %v563, %v547
    %v569 = vsel %vm567, %v564, %v549
    %v570 = vsel %vm567, %v565, %v551
    %v571 = vsel %vm567, %v566, %v553
    %v572 = vld [vmem:[%s11] sm:$0xff]
    %v573 = vld [vmem:[%s11 + $0x8] sm:$0xff]
    %v574 = vld [vmem:[%s11 + $0x10] sm:$0xff]
    %v575 = vld [vmem:[%s11 + $0x18] sm:$0xff]
    %v576 = vmul.f32 %v568, %v572
    %v577 = vmul.f32 %v569, %v573
    %v578 = vmul.f32 %v570, %v574
    %v579 = vmul.f32 %v571, %v575
    %v580 = vld [vmem:[#allocation16] sm:$0xff]
    %v581 = vld [vmem:[#allocation16 + $0x8] sm:$0xff]
    %v582 = vld [vmem:[#allocation16 + $0x10] sm:$0xff]
    %v583 = vld [vmem:[#allocation16 + $0x18] sm:$0xff]
    %v584 = vld [vmem:[#allocation16 + $0x20] sm:$0xff]
    %v585 = vld [vmem:[#allocation16 + $0x28] sm:$0xff]
    %v586 = vld [vmem:[#allocation16 + $0x30] sm:$0xff]
    %v587 = vld [vmem:[#allocation16 + $0x38] sm:$0xff]
    %v588 = vld [vmem:[#allocation16 + $0x40] sm:$0xff]
    %v589 = vld [vmem:[#allocation16 + $0x48] sm:$0xff]
    %v590 = vld [vmem:[#allocation16 + $0x50] sm:$0xff]
    %v591 = vld [vmem:[#allocation16 + $0x58] sm:$0xff]
    %v592 = vld [vmem:[#allocation16 + $0x60] sm:$0xff]
    %v593 = vld [vmem:[#allocation16 + $0x68] sm:$0xff]
    %v594 = vld [vmem:[#allocation16 + $0x70] sm:$0xff]
    %v595 = vld [vmem:[#allocation16 + $0x78] sm:$0xff]
    %v596 = vmul.f32 %v359, %v580
    %v597 = vmul.f32 %v364, %v581
    %v598 = vmul.f32 %v369, %v582
    %v599 = vmul.f32 %v374, %v583
    %v600 = vmul.f32 %v359, %v584
    %v601 = vmul.f32 %v364, %v585
    %v602 = vmul.f32 %v369, %v586
    %v603 = vmul.f32 %v374, %v587
    %v604 = vmul.f32 %v359, %v588
    %v605 = vmul.f32 %v364, %v589
    %v606 = vmul.f32 %v369, %v590
    %v607 = vmul.f32 %v374, %v591
    %v608 = vmul.f32 %v359, %v592
    %v609 = vmul.f32 %v364, %v593
    %v610 = vmul.f32 %v369, %v594
    %v611 = vmul.f32 %v374, %v595
    %v613 = vsel %vm183, %v257, 0
    %v616 = vsel %vm183, %v262, 0
    %618 = vmatprep.subr.mxu0 0.0
    %619 = vmatpush1.msra.mxu0 %v576
    %620 = vmatprep.subr.mxu0 0.0
    %621 = vmatpush1.msra.mxu0 %v577
    %622 = vmatprep.subr.mxu0 0.0
    %623 = vmatpush1.msra.mxu0 %v578
    %624 = vmatprep.subr.mxu0 0.0
    %625 = vmatpush1.msra.mxu0 %v579
    %626 = vmatprep.subr.mxu0 0.0
    %627 = vmatpush1.msra.mxu0 0.0
    %628 = vmatprep.subr.mxu0 0.0
    %629 = vmatpush1.msra.mxu0 0.0
    %630 = vmatprep.subr.mxu0 0.0
    %631 = vmatpush1.msra.mxu0 0.0
    %632 = vmatprep.subr.mxu0 0.0
    %633 = vmatpush1.msra.mxu0 0.0
    %634 = vmatprep.subr.mxu0 0.0
    %635 = vmatpush1.msra.mxu0 0.0
    %636 = vmatprep.subr.mxu0 0.0
    %637 = vmatpush1.msra.mxu0 0.0
    %638 = vmatprep.subr.mxu0 0.0
    %639 = vmatpush1.msra.mxu0 0.0
    %640 = vmatprep.subr.mxu0 0.0
    %641 = vmatpush1.msra.mxu0 0.0
    %642 = vmatprep.subr.mxu0 0.0
    %643 = vmatpush1.msra.mxu0 0.0
    %644 = vmatprep.subr.mxu0 0.0
    %645 = vmatpush1.msra.mxu0 0.0
    %646 = vmatprep.subr.mxu0 0.0
    %647 = vmatpush1.msra.mxu0 0.0
    %648 = vmatprep.subr.mxu0 0.0
    %649 = vmatpush1.msra.mxu0 0.0
    %650 = vmatprep.subr.mxu0 0.0
    %651 = vmatpush1.msra.mxu0 0.0
    %652 = vmatprep.subr.mxu0 0.0
    %653 = vmatpush1.msra.mxu0 0.0
    %654 = vmatprep.subr.mxu0 0.0
    %655 = vmatpush1.msra.mxu0 0.0
    %656 = vmatprep.subr.mxu0 0.0
    %657 = vmatpush1.msra.mxu0 0.0
    %658 = vmatprep.subr.mxu0 0.0
    %659 = vmatpush1.msra.mxu0 0.0
    %660 = vmatprep.subr.mxu0 0.0
    %661 = vmatpush1.msra.mxu0 0.0
    %662 = vmatprep.subr.mxu0 0.0
    %663 = vmatpush1.msra.mxu0 0.0
    %664 = vmatprep.subr.mxu0 0.0
    %665 = vmatpush1.msra.mxu0 0.0
    %666 = vmatprep.subr.mxu0 0.0
    %667 = vmatpush1.msra.mxu0 0.0
    %668 = vmatprep.subr.mxu0 0.0
    %669 = vmatpush1.msra.mxu0 0.0
    %670 = vmatprep.subr.mxu0 0.0
    %671 = vmatpush1.msra.mxu0 0.0
    %672 = vmatprep.subr.mxu0 0.0
    %673 = vmatpush1.msra.mxu0 0.0
    %674 = vmatprep.subr.mxu0 0.0
    %675 = vmatpush1.msra.mxu0 0.0
    %676 = vmatprep.subr.mxu0 0.0
    %677 = vmatpush1.msra.mxu0 0.0
    %678 = vmatprep.subr.mxu0 0.0
    %679 = vmatpush1.msra.mxu0 0.0
    %680 = vmatprep.subr.mxu0 0.0
    %681 = vmatpush1.msra.mxu0 0.0
    %682 = vmatprep.mubr.f32.mxu0 0.0
    %683 = vmatmul.mubr.f32.gmra.mrb[0].mxu0 %v613
    %v684 = vpop.f32.mrb[0].mxu0
    %v685 = vadd.f32 0.0, %v684
    %v686 = vpop.f32.mrb[0].mxu0
    %687 = vmatprep.mubr.f32.mxu0 0.0
    %688 = vmatmul.mubr.f32.gmra.mrb[0].mxu0 %v616
    %v689 = vpop.f32.mrb[0].mxu0
    %v690 = vadd.f32 0.0, %v689
    %v691 = vpop.f32.mrb[0].mxu0
    %692 = vdwg.mxu0
    %693 = vmax.xlane.f32.xlu0 %v685
    %v694 = vpop.xlane.xlu0 %693
    %695 = vmax.xlane.f32.xlu0 %v690
    %v696 = vpop.xlane.xlu0 %695
    %v697 = vsub.f32 %v685, %v694
    %v698 = vsub.f32 %v690, %v696
    %v699 = vmul.f32 %v697, 1.442695
    %v700 = vpow.pop %v699
    %v701 = vmul.f32 %v698, 1.442695
    %v702 = vpow.pop %v701
    %v703 = vld [vmem:[%s13] sm:$0xff]
    %v704 = vld [vmem:[%s13 + $0x8] sm:$0xff]
    %v705 = vmul.f32 %v700, %v703
    %v706 = vmul.f32 %v702, %v704
    %707 = vmatprep.subr.mxu0 0.0
    %708 = vmatpush1.msra.mxu0 %v580
    %709 = vmatprep.subr.mxu0 0.0
    %710 = vmatpush1.msra.mxu0 %v581
    %711 = vmatprep.subr.mxu0 0.0
    %712 = vmatpush1.msra.mxu0 %v582
    %713 = vmatprep.subr.mxu0 0.0
    %714 = vmatpush1.msra.mxu0 %v583
    %715 = vmatprep.subr.mxu0 0.0
    %716 = vmatpush1.msra.mxu0 %v584
    %717 = vmatprep.subr.mxu0 0.0
    %718 = vmatpush1.msra.mxu0 %v585
    %719 = vmatprep.subr.mxu0 0.0
    %720 = vmatpush1.msra.mxu0 %v586
    %721 = vmatprep.subr.mxu0 0.0
    %722 = vmatpush1.msra.mxu0 %v587
    %723 = vmatprep.subr.mxu0 0.0
    %724 = vmatpush1.msra.mxu0 %v588
    %725 = vmatprep.subr.mxu0 0.0
    %726 = vmatpush1.msra.mxu0 %v589
    %727 = vmatprep.subr.mxu0 0.0
    %728 = vmatpush1.msra.mxu0 %v590
    %729 = vmatprep.subr.mxu0 0.0
    %730 = vmatpush1.msra.mxu0 %v591
    %731 = vmatprep.subr.mxu0 0.0
    %732 = vmatpush1.msra.mxu0 %v592
    %733 = vmatprep.subr.mxu0 0.0
    %734 = vmatpush1.msra.mxu0 %v593
    %735 = vmatprep.subr.mxu0 0.0
    %736 = vmatpush1.msra.mxu0 %v594
    %737 = vmatprep.subr.mxu0 0.0
    %738 = vmatpush1.msra.mxu0 %v595
    %739 = vmatprep.subr.mxu0 0.0
    %740 = vmatpush1.msra.mxu0 0.0
    %741 = vmatprep.subr.mxu0 0.0
    %742 = vmatpush1.msra.mxu0 0.0
    %743 = vmatprep.subr.mxu0 0.0
    %744 = vmatpush1.msra.mxu0 0.0
    %745 = vmatprep.subr.mxu0 0.0
    %746 = vmatpush1.msra.mxu0 0.0
    %747 = vmatprep.subr.mxu0 0.0
    %748 = vmatpush1.msra.mxu0 0.0
    %749 = vmatprep.subr.mxu0 0.0
    %750 = vmatpush1.msra.mxu0 0.0
    %751 = vmatprep.subr.mxu0 0.0
    %752 = vmatpush1.msra.mxu0 0.0
    %753 = vmatprep.subr.mxu0 0.0
    %754 = vmatpush1.msra.mxu0 0.0
    %755 = vmatprep.subr.mxu0 0.0
    %756 = vmatpush1.msra.mxu0 0.0
    %757 = vmatprep.subr.mxu0 0.0
    %758 = vmatpush1.msra.mxu0 0.0
    %759 = vmatprep.subr.mxu0 0.0
    %760 = vmatpush1.msra.mxu0 0.0
    %761 = vmatprep.subr.mxu0 0.0
    %762 = vmatpush1.msra.mxu0 0.0
    %763 = vmatprep.subr.mxu0 0.0
    %764 = vmatpush1.msra.mxu0 0.0
    %765 = vmatprep.subr.mxu0 0.0
    %766 = vmatpush1.msra.mxu0 0.0
    %767 = vmatprep.subr.mxu0 0.0
    %768 = vmatpush1.msra.mxu0 0.0
    %769 = vmatprep.subr.mxu0 0.0
    %770 = vmatpush1.msra.mxu0 0.0
    %771 = vmatprep.mubr.f32.mxu0 0.0
    %772 = vmatmul.mubr.f32.gmra.mrb[0].mxu0 %v705
    %v773 = vpop.f32.mrb[0].mxu0
    %v774 = vadd.f32 0.0, %v773
    %v775 = vpop.f32.mrb[0].mxu0
    %776 = vmatprep.mubr.f32.mxu0 0.0
    %777 = vmatmul.mubr.f32.gmra.mrb[0].mxu0 %v706
    %v778 = vpop.f32.mrb[0].mxu0
    %v779 = vadd.f32 0.0, %v778
    %v780 = vpop.f32.mrb[0].mxu0
    %781 = vdwg.mxu0
    %v782 = vrcp.pop %v774
    %v783 = vrcp.pop %v779
    %784 = vmatprep.subr.mxu0 0.0
    %785 = vmatpush1.msra.mxu0 %v596
    %786 = vmatprep.subr.mxu0 0.0
    %787 = vmatpush1.msra.mxu0 %v597
    %788 = vmatprep.subr.mxu0 0.0
    %789 = vmatpush1.msra.mxu0 %v598
    %790 = vmatprep.subr.mxu0 0.0
    %791 = vmatpush1.msra.mxu0 %v599
    %792 = vmatprep.subr.mxu0 0.0
    %793 = vmatpush1.msra.mxu0 %v600
    %794 = vmatprep.subr.mxu0 0.0
    %795 = vmatpush1.msra.mxu0 %v601
    %796 = vmatprep.subr.mxu0 0.0
    %797 = vmatpush1.msra.mxu0 %v602
    %798 = vmatprep.subr.mxu0 0.0
    %799 = vmatpush1.msra.mxu0 %v603
    %800 = vmatprep.subr.mxu0 0.0
    %801 = vmatpush1.msra.mxu0 %v604
    %802 = vmatprep.subr.mxu0 0.0
    %803 = vmatpush1.msra.mxu0 %v605
    %804 = vmatprep.subr.mxu0 0.0
    %805 = vmatpush1.msra.mxu0 %v606
    %806 = vmatprep.subr.mxu0 0.0
    %807 = vmatpush1.msra.mxu0 %v607
    %808 = vmatprep.subr.mxu0 0.0
    %809 = vmatpush1.msra.mxu0 %v608
    %810 = vmatprep.subr.mxu0 0.0
    %811 = vmatpush1.msra.mxu0 %v609
    %812 = vmatprep.subr.mxu0 0.0
    %813 = vmatpush1.msra.mxu0 %v610
    %814 = vmatprep.subr.mxu0 0.0
    %815 = vmatpush1.msra.mxu0 %v611
    %816 = vmatprep.subr.mxu0 0.0
    %817 = vmatpush1.msra.mxu0 0.0
    %818 = vmatprep.subr.mxu0 0.0
    %819 = vmatpush1.msra.mxu0 0.0
    %820 = vmatprep.subr.mxu0 0.0
    %821 = vmatpush1.msra.mxu0 0.0
    %822 = vmatprep.subr.mxu0 0.0
    %823 = vmatpush1.msra.mxu0 0.0
    %824 = vmatprep.subr.mxu0 0.0
    %825 = vmatpush1.msra.mxu0 0.0
    %826 = vmatprep.subr.mxu0 0.0
    %827 = vmatpush1.msra.mxu0 0.0
    %828 = vmatprep.subr.mxu0 0.0
    %829 = vmatpush1.msra.mxu0 0.0
    %830 = vmatprep.subr.mxu0 0.0
    %831 = vmatpush1.msra.mxu0 0.0
    %832 = vmatprep.subr.mxu0 0.0
    %833 = vmatpush1.msra.mxu0 0.0
    %834 = vmatprep.subr.mxu0 0.0
    %835 = vmatpush1.msra.mxu0 0.0
    %836 = vmatprep.subr.mxu0 0.0
    %837 = vmatpush1.msra.mxu0 0.0
    %838 = vmatprep.subr.mxu0 0.0
    %839 = vmatpush1.msra.mxu0 0.0
    %840 = vmatprep.subr.mxu0 0.0
    %841 = vmatpush1.msra.mxu0 0.0
    %842 = vmatprep.subr.mxu0 0.0
    %843 = vmatpush1.msra.mxu0 0.0
    %844 = vmatprep.subr.mxu0 0.0
    %845 = vmatpush1.msra.mxu0 0.0
    %846 = vmatprep.subr.mxu0 0.0
    %847 = vmatpush1.msra.mxu0 0.0
    %848 = vmatprep.mubr.f32.mxu0 0.0
    %849 = vmatmul.mubr.f32.gmra.mrb[0].mxu0 %v705
    %v850 = vpop.f32.mrb[0].mxu0
    %v851 = vadd.f32 0.0, %v850
    %v852 = vpop.f32.mrb[0].mxu0
    %853 = vmatprep.mubr.f32.mxu0 0.0
    %854 = vmatmul.mubr.f32.gmra.mrb[0].mxu0 %v706
    %v855 = vpop.f32.mrb[0].mxu0
    %v856 = vadd.f32 0.0, %v855
    %v857 = vpop.f32.mrb[0].mxu0
    %858 = vdwg.mxu0
    %v859 = vmul.f32 %v851, %v782
    %v860 = vmul.f32 %v856, %v783
    %v861 = vld [vmem:[#allocation14] sm:$0xff]
    %v862 = vld [vmem:[#allocation14 + $0x8] sm:$0xff]
    %v863 = vld [vmem:[#allocation14 + $0x10] sm:$0xff]
    %v864 = vld [vmem:[#allocation14 + $0x18] sm:$0xff]
    %v865 = vld [vmem:[%s10] sm:$0x1]
    %v867 = vlaneseq
    %v868 = vshrl.u32 %v867, 7
    %v869 = vsub.s32 0, %v868
    %v870 = vrot.slane %v865, %v869
    %v873 = vsel %vm183, %v859, 0
    %v876 = vsel %vm183, %v860, 0
    %878 = vmatprep.subr.mxu0 0.0
    %879 = vmatpush1.msra.mxu0 %v861
    %880 = vmatprep.subr.mxu0 0.0
    %881 = vmatpush1.msra.mxu0 %v862
    %882 = vmatprep.subr.mxu0 0.0
    %883 = vmatpush1.msra.mxu0 %v863
    %884 = vmatprep.subr.mxu0 0.0
    %885 = vmatpush1.msra.mxu0 %v864
    %886 = vmatprep.subr.mxu0 0.0
    %887 = vmatpush1.msra.mxu0 0.0
    %888 = vmatprep.subr.mxu0 0.0
    %889 = vmatpush1.msra.mxu0 0.0
    %890 = vmatprep.subr.mxu0 0.0
    %891 = vmatpush1.msra.mxu0 0.0
    %892 = vmatprep.subr.mxu0 0.0
    %893 = vmatpush1.msra.mxu0 0.0
    %894 = vmatprep.subr.mxu0 0.0
    %895 = vmatpush1.msra.mxu0 0.0
    %896 = vmatprep.subr.mxu0 0.0
    %897 = vmatpush1.msra.mxu0 0.0
    %898 = vmatprep.subr.mxu0 0.0
    %899 = vmatpush1.msra.mxu0 0.0
    %900 = vmatprep.subr.mxu0 0.0
    %901 = vmatpush1.msra.mxu0 0.0
    %902 = vmatprep.subr.mxu0 0.0
    %903 = vmatpush1.msra.mxu0 0.0
    %904 = vmatprep.subr.mxu0 0.0
    %905 = vmatpush1.msra.mxu0 0.0
    %906 = vmatprep.subr.mxu0 0.0
    %907 = vmatpush1.msra.mxu0 0.0
    %908 = vmatprep.subr.mxu0 0.0
    %909 = vmatpush1.msra.mxu0 0.0
    %910 = vmatprep.subr.mxu0 0.0
    %911 = vmatpush1.msra.mxu0 0.0
    %912 = vmatprep.subr.mxu0 0.0
    %913 = vmatpush1.msra.mxu0 0.0
    %914 = vmatprep.subr.mxu0 0.0
    %915 = vmatpush1.msra.mxu0 0.0
    %916 = vmatprep.subr.mxu0 0.0
    %917 = vmatpush1.msra.mxu0 0.0
    %918 = vmatprep.subr.mxu0 0.0
    %919 = vmatpush1.msra.mxu0 0.0
    %920 = vmatprep.subr.mxu0 0.0
    %921 = vmatpush1.msra.mxu0 0.0
    %922 = vmatprep.subr.mxu0 0.0
    %923 = vmatpush1.msra.mxu0 0.0
    %924 = vmatprep.subr.mxu0 0.0
    %925 = vmatpush1.msra.mxu0 0.0
    %926 = vmatprep.subr.mxu0 0.0
    %927 = vmatpush1.msra.mxu0 0.0
    %928 = vmatprep.subr.mxu0 0.0
    %929 = vmatpush1.msra.mxu0 0.0
    %930 = vmatprep.subr.mxu0 0.0
    %931 = vmatpush1.msra.mxu0 0.0
    %932 = vmatprep.subr.mxu0 0.0
    %933 = vmatpush1.msra.mxu0 0.0
    %934 = vmatprep.subr.mxu0 0.0
    %935 = vmatpush1.msra.mxu0 0.0
    %936 = vmatprep.subr.mxu0 0.0
    %937 = vmatpush1.msra.mxu0 0.0
    %938 = vmatprep.subr.mxu0 0.0
    %939 = vmatpush1.msra.mxu0 0.0
    %940 = vmatprep.subr.mxu0 0.0
    %941 = vmatpush1.msra.mxu0 0.0
    %942 = vmatprep.mubr.f32.mxu0 0.0
    %943 = vmatmul.mubr.f32.gmra.mrb[0].mxu0 %v873
    %v944 = vpop.f32.mrb[0].mxu0
    %v945 = vadd.f32 %v870, %v944
    %v946 = vpop.f32.mrb[0].mxu0
    %947 = vmatprep.mubr.f32.mxu0 0.0
    %948 = vmatmul.mubr.f32.gmra.mrb[0].mxu0 %v876
    %v949 = vpop.f32.mrb[0].mxu0
    %v950 = vadd.f32 %v870, %v949
    %v951 = vpop.f32.mrb[0].mxu0
    %952 = vdwg.mxu0
    %953 = vst.msk [vmem:[#allocation17] sm:$0xff] %vm183, %v945
    %954 = vst.msk [vmem:[#allocation17 + $0x8] sm:$0xff] %vm183, %v950
    // Predicated region
    $region94: #{_lambda_.1} parent=1 // pred_check
      _
    $region95: #{_lambda_.1} parent=1 // pred_check_branch
      %956 = sbr.rel (0) target = $region97
    $region96: #{_lambda_.1} parent=1 // pred_region
      %s958 = ssub.s32 256, 256
      %959 = vsyncadd [#allocation4], %s958
      %s960 = sshll.u32 [#allocation17], 4
      %s961 = int_to_ptr.vmem [resolvable:$true] %s960
      %966 = dma.vmem_to_hbm [thread:$0]  %s961, 256, %s14, [#allocation4], 128, 128, 8
    $region97: #{_lambda_.1} parent=1 // pred_fallthru
      _
    // Predicated region
    $region98: #{_lambda_.1} parent=1 // pred_check
      _
    $region99: #{_lambda_.1} parent=1 // pred_check_branch
      %968 = sbr.rel (0) target = $region101
    $region100: #{_lambda_.1} parent=1 // pred_region
      %969 = dma.done [#allocation4], 256
    $region101: #{_lambda_.1} parent=1 // pred_fallthru
      _
    %970 = vsyncpa [#allocation3], 1
    %971 = vsyncpa [#allocation6], 1
    %972 = vsyncpa [#allocation9], 1
    %973 = vsyncpa [#allocation12], 1
    %974 = vsyncpa [#allocation15], 1
    %975 = vsyncpa [#allocation4], 1

</llo_original>
